<compile_context>
chip_gen: v6e
topology: v6e:2x2x1
jax: 0.10.0
libtpu: 0.0.40
codegen_flags: <defaults>
</compile_context>

<pallas_src>
import functools

import jax
import jax.numpy as jnp
from jax.experimental import pallas as pl
from jax.experimental.pallas import tpu as pltpu

LANES = 128
MAX_BLOCK_ROWS = 1024   # 1024 x 128 f32 = 512 KiB per input per block
NUM_CHUNKS = 2          # leading 'parallel' grid axis (both TCs on v7x)


def _dice_partial_kernel(pred_ref, targ_ref, out_ref, *, block_rows,
                         tiles_per_chunk, n_rows, needs_mask):
    i = pl.program_id(0)          # chunk index (parallel axis)
    j = pl.program_id(1)          # tile within chunk (reduction, 'arbitrary')

    @pl.when(j == 0)
    def _():
        out_ref[...] = jnp.zeros_like(out_ref)

    # torch.round == round-half-to-even == jnp.round; accumulate in f32.
    p = jnp.round(pred_ref[...].astype(jnp.float32))
    t = targ_ref[...].astype(jnp.float32)

    if needs_mask:
        # Zero rows past the real extent: covers the partial edge tile and any
        # clamped duplicate tile when n_tiles does not divide evenly across
        # chunks.  This VPU work hides entirely under the input DMA.
        global_tile = i * tiles_per_chunk + j
        row0 = global_tile * block_rows
        rows = jax.lax.broadcasted_iota(jnp.int32, (block_rows, LANES), 0)
        valid = (row0 + rows) < n_rows
        p = jnp.where(valid, p, 0.0)
        t = jnp.where(valid, t, 0.0)

    prod = p * t          # intersection terms
    tot = p + t           # A_sum + B_sum terms

    # Fold (block_rows, 128) -> (8, 128) with pure VPU adds into the resident
    # output block; no cross-lane (XLU) reduction per step.
    out_ref[0, 0, :, :] += prod.reshape(block_rows // 8, 8, LANES).sum(axis=0)
    out_ref[0, 1, :, :] += tot.reshape(block_rows // 8, 8, LANES).sum(axis=0)


def _sublane_multiple(dtype) -> int:
    # f32 -> 8 sublanes, bf16/fp16 -> 16, int8/bool -> 32.
    return {4: 8, 2: 16, 1: 32}.get(jnp.dtype(dtype).itemsize, 8)


def binary_dice_loss(predict, target, *, smooth=1.0, p=2, reduction="none"):
    """Pallas implementation of BinaryDiceLoss.forward.

    Note: the reference forward never uses `p` (denominator is a plain sum)
    and the loss is already a scalar, so 'mean' / 'sum' / 'none' all return
    the same scalar; we reproduce that exactly.
    """
    assert predict.shape[0] == target.shape[0], \
        "predict & target batch size don't match"
    if reduction not in ("mean", "sum", "none"):
        raise Exception("Unexpected reduction {}".format(reduction))

    pred_flat = jnp.reshape(predict, (-1,))   # native dtype; kernel upcasts
    targ_flat = jnp.reshape(target, (-1,))
    n = pred_flat.shape[0]

    n_rows = n // LANES
    n_main = n_rows * LANES

    # The <128-element tail is handled in plain JAX (avoids a full-array pad).
    if n_main < n:
        tp = jnp.round(pred_flat[n_main:].astype(jnp.float32))
        tt = targ_flat[n_main:].astype(jnp.float32)
        tail_inter = jnp.sum(tp * tt)
        tail_tot = jnp.sum(tp + tt)
    else:
        tail_inter = jnp.float32(0.0)
        tail_tot = jnp.float32(0.0)

    if n_rows == 0:
        inter = tail_inter
        a_plus_b = tail_tot
    else:
        if n_main == n:
            pred2d = pred_flat.reshape(n_rows, LANES)   # pure bitcast, no copy
            targ2d = targ_flat.reshape(n_rows, LANES)
        else:
            pred2d = pred_flat[:n_main].reshape(n_rows, LANES)
            targ2d = targ_flat[:n_main].reshape(n_rows, LANES)

        sub = max(_sublane_multiple(pred2d.dtype), _sublane_multiple(targ2d.dtype))
        block_rows = min(MAX_BLOCK_ROWS, ((n_rows + sub - 1) // sub) * sub)
        n_tiles = pl.cdiv(n_rows, block_rows)
        num_chunks = min(NUM_CHUNKS, n_tiles)
        tiles_per_chunk = pl.cdiv(n_tiles, num_chunks)
        needs_mask = (n_rows % block_rows != 0) or \
                     (num_chunks * tiles_per_chunk != n_tiles)

        def in_map(i, j):
            # Clamp so a duplicated last tile (when n_tiles % num_chunks != 0)
            # stays in bounds; its rows are fully masked in the kernel.
            return (jnp.minimum(i * tiles_per_chunk + j, n_tiles - 1), 0)

        kernel = functools.partial(
            _dice_partial_kernel,
            block_rows=block_rows,
            tiles_per_chunk=tiles_per_chunk,
            n_rows=n_rows,
            needs_mask=needs_mask,
        )

        bytes_in = n_main * (pred2d.dtype.itemsize + targ2d.dtype.itemsize)
        cost = pl.CostEstimate(
            flops=5 * n_main,
            transcendentals=0,
            bytes_accessed=bytes_in + num_chunks * 2 * 8 * LANES * 4,
        )

        partials = pl.pallas_call(
            kernel,
            out_shape=jax.ShapeDtypeStruct((num_chunks, 2, 8, LANES), jnp.float32),
            grid_spec=pltpu.PrefetchScalarGridSpec(
                num_scalar_prefetch=0,
                grid=(num_chunks, tiles_per_chunk),
                in_specs=[
                    pl.BlockSpec((block_rows, LANES), in_map),
                    pl.BlockSpec((block_rows, LANES), in_map),
                ],
                out_specs=pl.BlockSpec((1, 2, 8, LANES),
                                       lambda i, j: (i, 0, 0, 0)),
            ),
            compiler_params=pltpu.CompilerParams(
                dimension_semantics=("parallel", "arbitrary")),
            cost_estimate=cost,
        )(pred2d, targ2d)

        sums = jnp.sum(partials, axis=(0, 2, 3))   # (2,): [inter, A_sum+B_sum]
        inter = sums[0] + tail_inter
        a_plus_b = sums[1] + tail_tot

    loss = 1.0 - (2.0 * inter + smooth) / (a_plus_b + smooth)
    return loss   # scalar; identical for 'mean' / 'sum' / 'none'


def _reference(predict, target, smooth=1.0):
    p = jnp.round(jnp.reshape(predict, (-1,)).astype(jnp.float32))
    t = jnp.reshape(target, (-1,)).astype(jnp.float32)
    inter = jnp.sum(p * t)
    a = jnp.sum(p)
    b = jnp.sum(t)
    return 1.0 - (2.0 * inter + smooth) / (a + b + smooth)


if __name__ == "__main__":
    key = jax.random.PRNGKey(0)

    shapes = [
        (2, 4, 16, 16),    # primary: n % 128 == 0, single tile, no masking
        (2, 3, 17, 19),    # odd size: <128-elem tail + masked partial tile
        (4, 16, 64, 64),   # two parallel chunks, exact tiling
        (5, 16, 64, 64),   # two chunks + masked partial / duplicated tile
    ]

    for idx, shape in enumerate(shapes):
        k1, k2 = jax.random.split(jax.random.fold_in(key, idx))
        # predict: probabilities in [0,1]; target: binary mask
        predict = jax.random.uniform(k1, shape, dtype=jnp.float32)
        target = (jax.random.uniform(k2, shape, dtype=jnp.float32) > 0.5
                  ).astype(jnp.float32)

        loss = binary_dice_loss(predict, target, smooth=1.0, p=2,
                                reduction="none")
        loss = jax.block_until_ready(loss)

        ref = _reference(predict, target, smooth=1.0)
        assert jnp.allclose(loss, ref, rtol=1e-5, atol=1e-5), (shape, loss, ref)

    print("KERNEL_OK")
</pallas_src>

<mosaic_0001>
module attributes {stable_mosaic.version = 11 : i64} {
  func.func @_dice_partial_kernel(%arg0: i32, %arg1: i32, %arg2: memref<16x128xf32, #tpu.memory_space<vmem>>, %arg3: memref<16x128xf32, #tpu.memory_space<vmem>>, %arg4: memref<1x2x8x128xf32, #tpu.memory_space<vmem>>) attributes {dimension_semantics = [#tpu.dimension_semantics<parallel>, #tpu.dimension_semantics<arbitrary>], iteration_bounds = array<i64: 1, 1>, scalar_prefetch = 0 : i64, scratch_operands = 0 : i64, tpu.core_type = #tpu.core_type<tc>, window_params = [{transform_indices = @transform_0, window_bounds = array<i64: 16, 128>}, {transform_indices = @transform_1, window_bounds = array<i64: 16, 128>}, {transform_indices = @transform_2, window_bounds = array<i64: 1, 2, 8, 128>}]} {
    %c0_i32 = arith.constant 0 : i32
    %0 = arith.cmpi eq, %arg1, %c0_i32 : i32
    %1 = arith.extui %0 : i1 to i32
    %c0_i32_0 = arith.constant 0 : i32
    %2 = arith.cmpi ne, %1, %c0_i32_0 : i32
    scf.if %2 {
      %cst_20 = arith.constant 0.000000e+00 : f32
      %24 = vector.broadcast %cst_20 : f32 to vector<1x2x8x128xf32>
      %c0_21 = arith.constant 0 : index
      %c0_22 = arith.constant 0 : index
      %c0_23 = arith.constant 0 : index
      %c0_24 = arith.constant 0 : index
      %25 = vector.load %arg4[%c0_21, %c0_22, %c0_23, %c0_24] : memref<1x2x8x128xf32, #tpu.memory_space<vmem>>, vector<1x2x8x128xf32>
      tpu.vector_store %arg4[%c0_21, %c0_22, %c0_23, %c0_24], %24 {strides = array<i32>} : memref<1x2x8x128xf32, #tpu.memory_space<vmem>>, vector<1x2x8x128xf32>,
    } else {
    }
    %c0 = arith.constant 0 : index
    %c0_1 = arith.constant 0 : index
    %3 = vector.load %arg2[%c0, %c0_1] : memref<16x128xf32, #tpu.memory_space<vmem>>, vector<16x128xf32>
    %4 = math.roundeven %3 : vector<16x128xf32>
    %c0_2 = arith.constant 0 : index
    %c0_3 = arith.constant 0 : index
    %5 = vector.load %arg3[%c0_2, %c0_3] : memref<16x128xf32, #tpu.memory_space<vmem>>, vector<16x128xf32>
    %6 = arith.mulf %4, %5 : vector<16x128xf32>
    %7 = arith.addf %4, %5 : vector<16x128xf32>
    %c0_4 = arith.constant 0 : index
    %c0_5 = arith.constant 0 : index
    %c0_6 = arith.constant 0 : index
    %c0_7 = arith.constant 0 : index
    %8 = vector.load %arg4[%c0_4, %c0_5, %c0_6, %c0_7] : memref<1x2x8x128xf32, #tpu.memory_space<vmem>>, vector<1x1x8x128xf32>
    %9 = vector.shape_cast %8 : vector<1x1x8x128xf32> to vector<8x128xf32>
    %10 = vector.shape_cast %6 : vector<16x128xf32> to vector<2x8x128xf32>
    %cst = arith.constant dense<0.000000e+00> : vector<8x128xf32>
    %11 = vector.multi_reduction <add>, %10, %cst [0] : vector<2x8x128xf32> to vector<8x128xf32>
    %12 = arith.addf %9, %11 : vector<8x128xf32>
    %c0_8 = arith.constant 0 : index
    %c0_9 = arith.constant 0 : index
    %c0_10 = arith.constant 0 : index
    %c0_11 = arith.constant 0 : index
    %13 = vector.load %arg4[%c0_8, %c0_9, %c0_10, %c0_11] : memref<1x2x8x128xf32, #tpu.memory_space<vmem>>, vector<1x1x8x128xf32>
    %14 = vector.shape_cast %13 : vector<1x1x8x128xf32> to vector<8x128xf32>
    %15 = vector.shape_cast %12 : vector<8x128xf32> to vector<1x1x8x128xf32>
    tpu.vector_store %arg4[%c0_8, %c0_9, %c0_10, %c0_11], %15 {strides = array<i32>} : memref<1x2x8x128xf32, #tpu.memory_space<vmem>>, vector<1x1x8x128xf32>,
    %c0_12 = arith.constant 0 : index
    %c1 = arith.constant 1 : index
    %c0_13 = arith.constant 0 : index
    %c0_14 = arith.constant 0 : index
    %16 = vector.load %arg4[%c0_12, %c1, %c0_13, %c0_14] : memref<1x2x8x128xf32, #tpu.memory_space<vmem>>, vector<1x1x8x128xf32>
    %17 = vector.shape_cast %16 : vector<1x1x8x128xf32> to vector<8x128xf32>
    %18 = vector.shape_cast %7 : vector<16x128xf32> to vector<2x8x128xf32>
    %cst_15 = arith.constant dense<0.000000e+00> : vector<8x128xf32>
    %19 = vector.multi_reduction <add>, %18, %cst_15 [0] : vector<2x8x128xf32> to vector<8x128xf32>
    %20 = arith.addf %17, %19 : vector<8x128xf32>
    %c0_16 = arith.constant 0 : index
    %c1_17 = arith.constant 1 : index
    %c0_18 = arith.constant 0 : index
    %c0_19 = arith.constant 0 : index
    %21 = vector.load %arg4[%c0_16, %c1_17, %c0_18, %c0_19] : memref<1x2x8x128xf32, #tpu.memory_space<vmem>>, vector<1x1x8x128xf32>
    %22 = vector.shape_cast %21 : vector<1x1x8x128xf32> to vector<8x128xf32>
    %23 = vector.shape_cast %20 : vector<8x128xf32> to vector<1x1x8x128xf32>
    tpu.vector_store %arg4[%c0_16, %c1_17, %c0_18, %c0_19], %23 {strides = array<i32>} : memref<1x2x8x128xf32, #tpu.memory_space<vmem>>, vector<1x1x8x128xf32>,
    return
  }
  func.func @transform_0(%arg0: i32, %arg1: i32) -> (i32, i32) {
    %c1_i32 = arith.constant 1 : i32
    %0 = arith.muli %arg0, %c1_i32 : i32
    %1 = arith.addi %0, %arg1 : i32
    %c0_i32 = arith.constant 0 : i32
    %2 = arith.minsi %1, %c0_i32 : i32
    %c0_i32_0 = arith.constant 0 : i32
    %c0_i32_1 = arith.constant 0 : i32
    return %2, %c0_i32_0 : i32, i32
  }
  func.func @transform_1(%arg0: i32, %arg1: i32) -> (i32, i32) {
    %c1_i32 = arith.constant 1 : i32
    %0 = arith.muli %arg0, %c1_i32 : i32
    %1 = arith.addi %0, %arg1 : i32
    %c0_i32 = arith.constant 0 : i32
    %2 = arith.minsi %1, %c0_i32 : i32
    %c0_i32_0 = arith.constant 0 : i32
    %c0_i32_1 = arith.constant 0 : i32
    return %2, %c0_i32_0 : i32, i32
  }
  func.func @transform_2(%arg0: i32, %arg1: i32) -> (i32, i32, i32, i32) {
    %c0_i32 = arith.constant 0 : i32
    %c0_i32_0 = arith.constant 0 : i32
    %c0_i32_1 = arith.constant 0 : i32
    %c0_i32_2 = arith.constant 0 : i32
    return %arg0, %c0_i32, %c0_i32_0, %c0_i32_1 : i32, i32, i32, i32
  }
}

</mosaic_0001>

<llo_original>
// kernel: tpu_custom_call.1
$region0: #{tpu_custom_call.1}
  #allocation0 [shape = 'u32[]', space=smem, size = 0x4, offset = 0x4, fixed_abs, tag = 'smem constant byte address 0x4 - core index']
  #allocation1 [shape = 'u32[144,128]{1,0:T(1,128)}', space=vmem, size = 0x12000, scoped, tag = 'internal scratch']
  %s0 = inlined_call_operand.hbm [shape: f32[16,128], index: 0, kind: input, shape index: {}]
  %s1 = inlined_call_operand.hbm [shape: f32[16,128], index: 1, kind: input, shape index: {}]
  %s2 = inlined_call_operand.hbm [shape: f32[1,2,8,128], index: 2, kind: output, shape index: {}]
  %s3 = sld [smem:[#allocation0]]
  $region30: #{tpu_custom_call.1} parent=0
    _
  %s5 = ssub.s32 1, %s3
  %s6 = scalar_select 0, %s5, %s3
  $region1: #{tpu_custom_call.1} parent=0
    #allocation2 [shape = 'u8[8192]{0}', space=vmem, size = 0x2000, scoped, tag = 'input window, operand 0, single buffered']
    #allocation3 [shape = 's32[1]{0}', space=sflag, size = 0x4, scoped, tag = 'scoped memory for tpu_custom_call.1']
    #allocation4 [shape = 's32[1]{0}', space=sflag, size = 0x4, scoped, tag = 'scoped memory for tpu_custom_call.1']
    #allocation5 [shape = 'u8[8192]{0}', space=vmem, size = 0x2000, scoped, tag = 'input window, operand 1, single buffered']
    #allocation6 [shape = 's32[1]{0}', space=sflag, size = 0x4, scoped, tag = 'scoped memory for tpu_custom_call.1']
    #allocation7 [shape = 'u8[8192]{0}', space=vmem, size = 0x2000, scoped, tag = 'output window, operand 0, single buffered']
    %7 = vsyncpa [#allocation3], 0
    %8 = vsyncpa [#allocation6], 0
    %9 = vsyncpa [#allocation4], 0
    // Predicated region
    $region2: #{tpu_custom_call.1} parent=1 // pred_check
      _
    $region3: #{tpu_custom_call.1} parent=1 // pred_check_branch
      %11 = sbr.rel (0) target = $region5
    $region4: #{tpu_custom_call.1} parent=1 // pred_region
      %s12 = sadd.s32 0, 0
      %p13 = scmp.lt.s32.totalorder %s12, 0
      %s14 = scalar_select %p13, %s12, 0
      %s15 = smul.u32 2, %s14
      %s17 = ssub.s32 256, 256
      %18 = vsyncadd [#allocation3], %s17
      %s19 = smul.addr %s15, 128
      %s20 = scalar_lea.hbm %s0, %s19
      %s21 = sshll.u32 [#allocation2], 4
      %s22 = int_to_ptr.vmem [resolvable:$true] %s21
      %27 = dma.hbm_to_vmem [thread:$0]  %s20, 256, %s22, [#allocation3], 128, 128, 8
    $region5: #{tpu_custom_call.1} parent=1 // pred_fallthru
      _
    // Predicated region
    $region6: #{tpu_custom_call.1} parent=1 // pred_check
      _
    $region7: #{tpu_custom_call.1} parent=1 // pred_check_branch
      %29 = sbr.rel (0) target = $region9
    $region8: #{tpu_custom_call.1} parent=1 // pred_region
      %s30 = sadd.s32 0, 0
      %p31 = scmp.lt.s32.totalorder %s30, 0
      %s32 = scalar_select %p31, %s30, 0
      %s33 = smul.u32 2, %s32
      %s35 = ssub.s32 256, 256
      %36 = vsyncadd [#allocation6], %s35
      %s37 = smul.addr %s33, 128
      %s38 = scalar_lea.hbm %s1, %s37
      %s39 = sshll.u32 [#allocation5], 4
      %s40 = int_to_ptr.vmem [resolvable:$true] %s39
      %45 = dma.hbm_to_vmem [thread:$0]  %s38, 256, %s40, [#allocation6], 128, 128, 8
    $region9: #{tpu_custom_call.1} parent=1 // pred_fallthru
      _
    // Predicated region
    $region10: #{tpu_custom_call.1} parent=1 // pred_check
      _
    $region11: #{tpu_custom_call.1} parent=1 // pred_check_branch
      %47 = sbr.rel (0) target = $region13
    $region12: #{tpu_custom_call.1} parent=1 // pred_region
      %48 = dma.done [#allocation3], 256
    $region13: #{tpu_custom_call.1} parent=1 // pred_fallthru
      _
    // Predicated region
    $region14: #{tpu_custom_call.1} parent=1 // pred_check
      _
    $region15: #{tpu_custom_call.1} parent=1 // pred_check_branch
      %50 = sbr.rel (0) target = $region17
    $region16: #{tpu_custom_call.1} parent=1 // pred_region
      %51 = dma.done [#allocation6], 256
    $region17: #{tpu_custom_call.1} parent=1 // pred_fallthru
      _
    %s52 = sadd.s32 0, 0
    %p53 = scmp.lt.s32.totalorder %s52, 0
    %s54 = scalar_select %p53, %s52, 0
    %s55 = smul.u32 2, %s54
    %s56 = sadd.s32 0, 0
    %p57 = scmp.lt.s32.totalorder %s56, 0
    %s58 = scalar_select %p57, %s56, 0
    %s59 = smul.u32 2, %s58
    %p60 = scmp.eq.s32.totalorder 0, 0
    // Predicated region
    $region18: #{tpu_custom_call.1} parent=1 // pred_check
      %p61 = pneg %p60
    $region19: #{tpu_custom_call.1} parent=1 // pred_check_branch
      %63 = sbr.rel (%p61) target = $region21
    $region20: #{tpu_custom_call.1} parent=1 // pred_region
      %64 = vst [vmem:[#allocation7] sm:$0xff] 0.0
      %65 = vst [vmem:[#allocation7 + $0x8] sm:$0xff] 0.0
    $region21: #{tpu_custom_call.1} parent=1 // pred_fallthru
      _
    %v66 = vld [vmem:[#allocation2] sm:$0xff]
    %v67 = vld [vmem:[#allocation2 + $0x8] sm:$0xff]
    %v68 = vround.ne.pseudo %v66
    %v69 = vround.ne.pseudo %v67
    %v70 = vld [vmem:[#allocation5] sm:$0xff]
    %v71 = vld [vmem:[#allocation5 + $0x8] sm:$0xff]
    %v72 = vmul.f32 %v68, %v70
    %v73 = vmul.f32 %v69, %v71
    %v74 = vadd.f32 %v68, %v70
    %v75 = vadd.f32 %v69, %v71
    %v76 = vld [vmem:[#allocation7] sm:$0xff]
    %v77 = vadd.f32 %v72, %v73
    %v78 = vadd.f32 %v76, %v77
    %79 = vst [vmem:[#allocation7] sm:$0xff] %v78
    %s80 = scalar_lea.vmem [#allocation7], 8
    %v81 = vld [vmem:[%s80] sm:$0xff]
    %v82 = vadd.f32 %v74, %v75
    %v83 = vadd.f32 %v81, %v82
    %84 = vst [vmem:[%s80] sm:$0xff] %v83
    // Predicated region
    $region22: #{tpu_custom_call.1} parent=1 // pred_check
      _
    $region23: #{tpu_custom_call.1} parent=1 // pred_check_branch
      %86 = sbr.rel (0) target = $region25
    $region24: #{tpu_custom_call.1} parent=1 // pred_region
      %s88 = ssub.s32 256, 256
      %89 = vsyncadd [#allocation4], %s88
      %s90 = sshll.u32 [#allocation7], 4
      %s91 = int_to_ptr.vmem [resolvable:$true] %s90
      %96 = dma.vmem_to_hbm [thread:$0]  %s91, 256, %s2, [#allocation4], 128, 128, 8
    $region25: #{tpu_custom_call.1} parent=1 // pred_fallthru
      _
    // Predicated region
    $region26: #{tpu_custom_call.1} parent=1 // pred_check
      _
    $region27: #{tpu_custom_call.1} parent=1 // pred_check_branch
      %98 = sbr.rel (0) target = $region29
    $region28: #{tpu_custom_call.1} parent=1 // pred_region
      %99 = dma.done [#allocation4], 256
    $region29: #{tpu_custom_call.1} parent=1 // pred_fallthru
      _
    %100 = vsyncpa [#allocation3], 1
    %101 = vsyncpa [#allocation6], 1
    %102 = vsyncpa [#allocation4], 1

</llo_original>
